<compile_context>
chip_gen: v7x
topology: tpu7x:2x2x1
jax: 0.10.0
libtpu: 0.0.40
codegen_flags: <defaults>
</compile_context>

<pallas_src>
import jax
import jax.numpy as jnp
from jax.experimental import pallas as pl
from jax.experimental.pallas import tpu as pltpu

LANE = 128


def _round_up(x, m):
    return (x + m - 1) // m * m


def _vmem_capacity_bytes():
    try:
        return int(pltpu.get_tpu_info().vmem_capacity_bytes)
    except Exception:
        return 64 << 20  # conservative: assume the smallest (v7x) per-TC VMEM


# ----------------------------- kernels ---------------------------------------


def _mlp_kernel_resident(x_ref, w1_ref, b1_ref, w2_ref, b2_ref, o_ref):
    """Both weight matrices resident in VMEM; one grid axis over the batch."""
    # fc1 on the MXU, f32 accumulation; bias + ReLU in f32 on the VPU.
    h = jnp.dot(x_ref[...], w1_ref[...], preferred_element_type=jnp.float32)
    h = jnp.maximum(h + b1_ref[...], 0.0)
    # fc2: downcast the post-ReLU activations to the (bf16) weight dtype so the
    # second matmul also runs at full bf16 MXU throughput; accumulate in f32.
    out = jnp.dot(h.astype(w2_ref.dtype), w2_ref[...],
                  preferred_element_type=jnp.float32)
    o_ref[...] = (out + b2_ref[...]).astype(o_ref.dtype)


def _mlp_kernel_stream_h(x_ref, w1_ref, b1_ref, w2_ref, b2_ref, o_ref, acc_ref):
    """Weight-streaming fallback: trailing 'arbitrary' grid axis tiles H.

    Valid because ReLU is elementwise over H and fc2 sums over H, so
    sum_j relu(x @ w1[:, j] + b1[j]) @ w2[j, :] reconstructs the full MLP.
    """
    hj = pl.program_id(1)

    @pl.when(hj == 0)
    def _init():
        acc_ref[...] = jnp.zeros_like(acc_ref)

    h = jnp.dot(x_ref[...], w1_ref[...], preferred_element_type=jnp.float32)
    h = jnp.maximum(h + b1_ref[...], 0.0)
    acc_ref[...] += jnp.dot(h.astype(w2_ref.dtype), w2_ref[...],
                            preferred_element_type=jnp.float32)

    @pl.when(hj == pl.num_programs(1) - 1)
    def _finalize():
        o_ref[...] = (acc_ref[...] + b2_ref[...]).astype(o_ref.dtype)


# ------------------------- parameter preparation ------------------------------


def prepare_mlp_params(w1, b1, w2, b2, *, compute_dtype=jnp.bfloat16):
    """One-time pad (to 128 lanes) + cast of the MLP parameters.

    Hoisted out of mlp_forward so every forward call does NOT re-read/re-write
    the weight matrices in HBM. Zero padding is mathematically inert: padded x
    columns hit zero w1 rows, padded hidden units have zero bias (relu(0)=0)
    and zero w2 rows, padded output columns are sliced away.
    """
    D_in, H = w1.shape
    H2, D_out = w2.shape
    assert H2 == H and b1.shape == (H,) and b2.shape == (D_out,)
    cdt = compute_dtype
    D_in_p, H_p, D_out_p = (_round_up(d, LANE) for d in (D_in, H, D_out))
    w1p = jnp.zeros((D_in_p, H_p), cdt).at[:D_in, :H].set(w1.astype(cdt))
    w2p = jnp.zeros((H_p, D_out_p), cdt).at[:H, :D_out].set(w2.astype(cdt))
    b1p = jnp.zeros((1, H_p), jnp.float32).at[0, :H].set(b1.astype(jnp.float32))
    b2p = jnp.zeros((1, D_out_p), jnp.float32).at[0, :D_out].set(b2.astype(jnp.float32))
    return {"w1": w1p, "b1": b1p, "w2": w2p, "b2": b2p,
            "dims": (D_in, H, D_out), "compute_dtype": cdt}


# ------------------------------- forward --------------------------------------


def mlp_forward(x, params, *, block_b=512, block_h=None, out_dtype=None):
    """Fused MLP forward: relu(x @ w1 + b1) @ w2 + b2.

    x: [B, D_in]; params from prepare_mlp_params(). Returns [B, D_out].
    Matmuls run in the params' compute dtype (default bf16) with f32
    accumulation; expect bf16-level (~1e-2 relative) deviation from f32.
    """
    w1p, b1p, w2p, b2p = params["w1"], params["b1"], params["w2"], params["b2"]
    D_in, H, D_out = params["dims"]
    cdt = params["compute_dtype"]
    D_in_p, H_p = w1p.shape
    D_out_p = w2p.shape[1]

    B = x.shape[0]
    assert x.shape == (B, D_in)
    out_dtype = out_dtype if out_dtype is not None else x.dtype

    csize = jnp.dtype(cdt).itemsize
    osize = jnp.dtype(out_dtype).itemsize
    row_align = 16 if csize == 2 else 8

    # ----- device-aware VMEM budget -------------------------------------------
    cap = _vmem_capacity_bytes()
    budget = max(cap - (8 << 20), 24 << 20)          # headroom for the compiler

    weight_bytes = (D_in_p + D_out_p) * H_p * csize + (H_p + D_out_p) * 4

    # ----- H tiling: weight-resident if the weights fit, else stream H --------
    if block_h is None:
        block_h = H_p if weight_bytes <= int(0.6 * budget) else 4 * LANE
    block_h = max(LANE, min(_round_up(block_h, LANE), H_p))
    if block_h < H_p:
        # block_h must evenly divide H_p (both multiples of 128).
        k, t = H_p // LANE, block_h // LANE
        t = max(d for d in range(1, k + 1) if k % d == 0 and d <= t)
        block_h = t * LANE
    resident = block_h == H_p

    def vmem_estimate(bb, bh):
        wbuf = 1 if bh == H_p else 2                 # streamed slabs double-buffered
        wbytes = wbuf * ((D_in_p + D_out_p) * bh * csize + bh * 4) + D_out_p * 4
        acc = 0 if bh == H_p else bb * D_out_p * 4   # f32 accumulator scratch
        return (wbytes
                + 2 * bb * D_in_p * csize            # x tiles   (double-buffered)
                + 2 * bb * D_out_p * osize           # out tiles (double-buffered)
                + bb * (bh + D_out_p) * 4            # f32 hidden + pre-store temps
                + acc)

    # ----- batch tiling: shrink until the estimate fits, then balance tiles ----
    bb = max(row_align, min(block_b, _round_up(B, row_align)))
    while bb > row_align and vmem_estimate(bb, block_h) > int(0.85 * budget):
        bb = max(row_align, _round_up(bb // 2, row_align))
    nb = pl.cdiv(B, bb)
    block_b = _round_up(pl.cdiv(B, nb), row_align)   # balanced: waste <= nb*row_align rows
    B_p = nb * block_b

    vmem_limit = min(max(int(1.25 * vmem_estimate(block_b, block_h)) + (4 << 20),
                         16 << 20), cap)

    # ----- pad x only when needed ----------------------------------------------
    if B_p == B and D_in == D_in_p and x.dtype == cdt:
        xp = x
    else:
        xp = jnp.zeros((B_p, D_in_p), cdt).at[:B, :D_in].set(x.astype(cdt))

    flops = 2 * B_p * H_p * (D_in_p + D_out_p)
    bytes_accessed = (B_p * D_in_p * csize + B_p * D_out_p * osize
                      + (D_in_p + D_out_p) * H_p * csize + (H_p + D_out_p) * 4)
    cost = pl.CostEstimate(flops=flops, transcendentals=0,
                           bytes_accessed=bytes_accessed)

    if resident:
        kernel = _mlp_kernel_resident
        grid = (nb,)
        resident_buf = pl.Buffered(1)                # constant index_map -> 1 buffer
        in_specs = [
            pl.BlockSpec((block_b, D_in_p), lambda i: (i, 0)),      # x (streamed)
            pl.BlockSpec((D_in_p, H_p), lambda i: (0, 0),
                         pipeline_mode=resident_buf),               # w1 (resident)
            pl.BlockSpec((1, H_p), lambda i: (0, 0),
                         pipeline_mode=resident_buf),               # b1 (resident)
            pl.BlockSpec((H_p, D_out_p), lambda i: (0, 0),
                         pipeline_mode=resident_buf),               # w2 (resident)
            pl.BlockSpec((1, D_out_p), lambda i: (0, 0),
                         pipeline_mode=resident_buf),               # b2 (resident)
        ]
        out_specs = pl.BlockSpec((block_b, D_out_p), lambda i: (i, 0))
        scratch = []
        dims = ("parallel",)
    else:
        kernel = _mlp_kernel_stream_h
        grid = (nb, H_p // block_h)
        in_specs = [
            pl.BlockSpec((block_b, D_in_p), lambda i, j: (i, 0)),   # x (held across j)
            pl.BlockSpec((D_in_p, block_h), lambda i, j: (0, j)),   # w1 slab (streamed)
            pl.BlockSpec((1, block_h), lambda i, j: (0, j)),        # b1 slab
            pl.BlockSpec((block_h, D_out_p), lambda i, j: (j, 0)),  # w2 slab (streamed)
            pl.BlockSpec((1, D_out_p), lambda i, j: (0, 0),
                         pipeline_mode=pl.Buffered(1)),             # b2 (resident)
        ]
        out_specs = pl.BlockSpec((block_b, D_out_p), lambda i, j: (i, 0))
        scratch = [pltpu.VMEM((block_b, D_out_p), jnp.float32)]
        dims = ("parallel", "arbitrary")

    out_p = pl.pallas_call(
        kernel,
        out_shape=jax.ShapeDtypeStruct((B_p, D_out_p), out_dtype),
        grid_spec=pltpu.PrefetchScalarGridSpec(
            num_scalar_prefetch=0,
            grid=grid,
            in_specs=in_specs,
            out_specs=out_specs,
            scratch_shapes=scratch,
        ),
        compiler_params=pltpu.CompilerParams(
            dimension_semantics=dims,
            vmem_limit_bytes=int(vmem_limit)),
        cost_estimate=cost,
    )(xp, w1p, b1p, w2p, b2p)

    if B_p == B and D_out == D_out_p:
        return out_p
    return out_p[:B, :D_out]


# ------------------------------ init / test -----------------------------------


def init_mlp_params(key, input_dim, output_dim, dtype=jnp.float32):
    """Deterministic init mirroring nn.Linear defaults: U(-1/sqrt(fan_in), 1/sqrt(fan_in))."""
    hidden = input_dim * 2
    k1, k2, k3, k4 = jax.random.split(key, 4)
    bound1 = 1.0 / (input_dim ** 0.5)
    bound2 = 1.0 / (hidden ** 0.5)
    # Stored already transposed: [D_in, H] and [H, D_out].
    w1 = jax.random.uniform(k1, (input_dim, hidden), dtype, -bound1, bound1)
    b1 = jax.random.uniform(k2, (hidden,), dtype, -bound1, bound1)
    w2 = jax.random.uniform(k3, (hidden, output_dim), dtype, -bound2, bound2)
    b2 = jax.random.uniform(k4, (output_dim,), dtype, -bound2, bound2)
    return w1, b1, w2, b2


if __name__ == "__main__":
    key = jax.random.PRNGKey(0)
    kx, kp = jax.random.split(key)

    batch = 8
    input_dim = 32      # -> hidden = 64
    output_dim = 16

    x = jax.random.normal(kx, (batch, input_dim), dtype=jnp.float32)
    w1, b1, w2, b2 = init_mlp_params(kp, input_dim, output_dim)

    # One-time parameter prep (pad + cast), then the fused forward.
    params = prepare_mlp_params(w1, b1, w2, b2)
    out = mlp_forward(x, params)
    out = jax.block_until_ready(out)

    # Also exercise the H-streaming fallback path at these tiny shapes.
    out_stream = jax.block_until_ready(mlp_forward(x, params, block_h=LANE))

    # Pure-JAX f32 reference; tolerance widened for bf16 matmuls (f32 accumulate).
    ref = jnp.maximum(x @ w1 + b1, 0.0) @ w2 + b2
    assert out.shape == (batch, output_dim)
    assert jnp.allclose(out, ref, atol=5e-2, rtol=5e-2), float(jnp.max(jnp.abs(out - ref)))
    assert jnp.allclose(out_stream, ref, atol=5e-2, rtol=5e-2), \
        float(jnp.max(jnp.abs(out_stream - ref)))

    print("KERNEL_OK")
</pallas_src>

<mosaic_0001>
module attributes {stable_mosaic.version = 11 : i64} {
  func.func @_mlp_kernel_resident(%arg0: i32, %arg1: memref<16x128xbf16, #tpu.memory_space<vmem>>, %arg2: memref<128x128xbf16, #tpu.memory_space<vmem>>, %arg3: memref<1x128xf32, #tpu.memory_space<vmem>>, %arg4: memref<128x128xbf16, #tpu.memory_space<vmem>>, %arg5: memref<1x128xf32, #tpu.memory_space<vmem>>, %arg6: memref<16x128xf32, #tpu.memory_space<vmem>>) attributes {dimension_semantics = [#tpu.dimension_semantics<parallel>], iteration_bounds = array<i64: 1>, scalar_prefetch = 0 : i64, scratch_operands = 0 : i64, tpu.core_type = #tpu.core_type<tc>, window_params = [{transform_indices = @transform_0, window_bounds = array<i64: 16, 128>}, {pipeline_mode = #tpu.pipeline_mode<synchronous>, transform_indices = @transform_1, window_bounds = array<i64: 128, 128>}, {pipeline_mode = #tpu.pipeline_mode<synchronous>, transform_indices = @transform_2, window_bounds = array<i64: 1, 128>}, {pipeline_mode = #tpu.pipeline_mode<synchronous>, transform_indices = @transform_3, window_bounds = array<i64: 128, 128>}, {pipeline_mode = #tpu.pipeline_mode<synchronous>, transform_indices = @transform_4, window_bounds = array<i64: 1, 128>}, {transform_indices = @transform_5, window_bounds = array<i64: 16, 128>}]} {
    %c0 = arith.constant 0 : index
    %c0_0 = arith.constant 0 : index
    %0 = vector.load %arg1[%c0, %c0_0] : memref<16x128xbf16, #tpu.memory_space<vmem>>, vector<16x128xbf16>
    %c0_1 = arith.constant 0 : index
    %c0_2 = arith.constant 0 : index
    %1 = vector.load %arg2[%c0_1, %c0_2] : memref<128x128xbf16, #tpu.memory_space<vmem>>, vector<128x128xbf16>
    %cst = arith.constant dense<0.000000e+00> : vector<16x128xf32>
    %2 = tpu.matmul %0, %1, %cst {dimension_numbers = #tpu.dot_dimension_numbers<[1], [0], [0], [1], [0, 0, 1, 1], [], []>} : vector<16x128xbf16>, vector<128x128xbf16>, vector<16x128xf32> -> vector<16x128xf32>
    %c0_3 = arith.constant 0 : index
    %c0_4 = arith.constant 0 : index
    %3 = vector.load %arg3[%c0_3, %c0_4] : memref<1x128xf32, #tpu.memory_space<vmem>>, vector<1x128xf32>
    %4 = vector.broadcast %3 : vector<1x128xf32> to vector<16x128xf32>
    %5 = arith.addf %2, %4 : vector<16x128xf32>
    %cst_5 = arith.constant 0.000000e+00 : f32
    %6 = vector.broadcast %cst_5 : f32 to vector<16x128xf32>
    %7 = arith.maximumf %5, %6 : vector<16x128xf32>
    %8 = arith.truncf %7 : vector<16x128xf32> to vector<16x128xbf16>
    %c0_6 = arith.constant 0 : index
    %c0_7 = arith.constant 0 : index
    %9 = vector.load %arg4[%c0_6, %c0_7] : memref<128x128xbf16, #tpu.memory_space<vmem>>, vector<128x128xbf16>
    %cst_8 = arith.constant dense<0.000000e+00> : vector<16x128xf32>
    %10 = tpu.matmul %8, %9, %cst_8 {dimension_numbers = #tpu.dot_dimension_numbers<[1], [0], [0], [1], [0, 0, 1, 1], [], []>} : vector<16x128xbf16>, vector<128x128xbf16>, vector<16x128xf32> -> vector<16x128xf32>
    %c0_9 = arith.constant 0 : index
    %c0_10 = arith.constant 0 : index
    %11 = vector.load %arg5[%c0_9, %c0_10] : memref<1x128xf32, #tpu.memory_space<vmem>>, vector<1x128xf32>
    %12 = vector.broadcast %11 : vector<1x128xf32> to vector<16x128xf32>
    %13 = arith.addf %10, %12 : vector<16x128xf32>
    %c0_11 = arith.constant 0 : index
    %c0_12 = arith.constant 0 : index
    %14 = vector.load %arg6[%c0_11, %c0_12] : memref<16x128xf32, #tpu.memory_space<vmem>>, vector<16x128xf32>
    tpu.vector_store %arg6[%c0_11, %c0_12], %13 {strides = array<i32>} : memref<16x128xf32, #tpu.memory_space<vmem>>, vector<16x128xf32>,
    return
  }
  func.func @transform_0(%arg0: i32) -> (i32, i32) {
    %c0_i32 = arith.constant 0 : i32
    %c0_i32_0 = arith.constant 0 : i32
    return %arg0, %c0_i32 : i32, i32
  }
  func.func @transform_1(%arg0: i32) -> (i32, i32) {
    %c0_i32 = arith.constant 0 : i32
    %c0_i32_0 = arith.constant 0 : i32
    %c0_i32_1 = arith.constant 0 : i32
    return %c0_i32, %c0_i32_0 : i32, i32
  }
  func.func @transform_2(%arg0: i32) -> (i32, i32) {
    %c0_i32 = arith.constant 0 : i32
    %c0_i32_0 = arith.constant 0 : i32
    %c0_i32_1 = arith.constant 0 : i32
    return %c0_i32, %c0_i32_0 : i32, i32
  }
  func.func @transform_3(%arg0: i32) -> (i32, i32) {
    %c0_i32 = arith.constant 0 : i32
    %c0_i32_0 = arith.constant 0 : i32
    %c0_i32_1 = arith.constant 0 : i32
    return %c0_i32, %c0_i32_0 : i32, i32
  }
  func.func @transform_4(%arg0: i32) -> (i32, i32) {
    %c0_i32 = arith.constant 0 : i32
    %c0_i32_0 = arith.constant 0 : i32
    %c0_i32_1 = arith.constant 0 : i32
    return %c0_i32, %c0_i32_0 : i32, i32
  }
  func.func @transform_5(%arg0: i32) -> (i32, i32) {
    %c0_i32 = arith.constant 0 : i32
    %c0_i32_0 = arith.constant 0 : i32
    return %arg0, %c0_i32 : i32, i32
  }
}

</mosaic_0001>

<llo_original>
// kernel: tpu_custom_call.1
$region0: #{tpu_custom_call.1}
  #allocation0 [shape = 'u32[]', space=smem, size = 0x4, offset = 0x4, fixed_abs, tag = 'smem constant byte address 0x4 - core index']
  #allocation1 [shape = 'u32[144,128]{1,0:T(1,128)}', space=vmem, size = 0x12000, scoped, tag = 'internal scratch']
  %s0 = inlined_call_operand.hbm [shape: bf16[16,128], index: 0, kind: input, shape index: {}]
  %s1 = inlined_call_operand.hbm [shape: bf16[128,128], index: 1, kind: input, shape index: {}]
  %s2 = inlined_call_operand.vmem [shape: f32[1,128], index: 2, kind: input, shape index: {}]
  %s3 = inlined_call_operand.hbm [shape: bf16[128,128], index: 3, kind: input, shape index: {}]
  %s4 = inlined_call_operand.vmem [shape: f32[1,128], index: 4, kind: input, shape index: {}]
  %s5 = inlined_call_operand.hbm [shape: f32[16,128], index: 5, kind: output, shape index: {}]
  %s6 = sld [smem:[#allocation0]]
  $region42: #{tpu_custom_call.1} parent=0
    _
  %s8 = ssub.s32 1, %s6
  %s9 = scalar_select 0, %s8, %s6
  $region1: #{tpu_custom_call.1} parent=0
    #allocation2 [shape = 'u8[4096]{0}', space=vmem, size = 0x1000, scoped, tag = 'input window, operand 0, single buffered']
    #allocation3 [shape = 's32[1]{0}', space=sflag, size = 0x4, scoped, tag = 'scoped memory for tpu_custom_call.1']
    #allocation4 [shape = 's32[1]{0}', space=sflag, size = 0x4, scoped, tag = 'scoped memory for tpu_custom_call.1']
    #allocation5 [shape = 'u8[32768]{0}', space=vmem, size = 0x8000, scoped, tag = 'input window, operand 1, single buffered']
    #allocation6 [shape = 's32[1]{0}', space=sflag, size = 0x4, scoped, tag = 'scoped memory for tpu_custom_call.1']
    #allocation7 [shape = 'u8[32768]{0}', space=vmem, size = 0x8000, scoped, tag = 'input window, operand 3, single buffered']
    #allocation8 [shape = 'u8[8192]{0}', space=vmem, size = 0x2000, scoped, tag = 'output window, operand 0, single buffered']
    %10 = vsyncpa [#allocation3], 0
    %11 = vsyncpa [#allocation6], 0
    %12 = vsyncpa [#allocation4], 0
    // Predicated region
    $region2: #{tpu_custom_call.1} parent=1 // pred_check
      _
    $region3: #{tpu_custom_call.1} parent=1 // pred_check_branch
      %14 = sbr.rel (0) target = $region5
    $region4: #{tpu_custom_call.1} parent=1 // pred_region
      %s16 = ssub.s32 128, 128
      %17 = vsyncadd [#allocation3], %s16
      %s18 = sshll.u32 [#allocation2], 4
      %s19 = int_to_ptr.vmem [resolvable:$true] %s18
      %24 = dma.hbm_to_vmem [thread:$0]  %s0, 128, %s19, [#allocation3], 64, 64, 4
    $region5: #{tpu_custom_call.1} parent=1 // pred_fallthru
      _
    // Predicated region
    $region6: #{tpu_custom_call.1} parent=1 // pred_check
      _
    $region7: #{tpu_custom_call.1} parent=1 // pred_check_branch
      %26 = sbr.rel (0) target = $region9
    $region8: #{tpu_custom_call.1} parent=1 // pred_region
      %s28 = ssub.s32 1024, 1024
      %29 = vsyncadd [#allocation6], %s28
      %s30 = sshll.u32 [#allocation5], 4
      %s31 = int_to_ptr.vmem [resolvable:$true] %s30
      %36 = dma.hbm_to_vmem [thread:$0]  %s1, 1024, %s31, [#allocation6], 64, 64, 4
    $region9: #{tpu_custom_call.1} parent=1 // pred_fallthru
      _
    // Predicated region
    $region10: #{tpu_custom_call.1} parent=1 // pred_check
      _
    $region11: #{tpu_custom_call.1} parent=1 // pred_check_branch
      %38 = sbr.rel (0) target = $region13
    $region12: #{tpu_custom_call.1} parent=1 // pred_region
      _
    $region13: #{tpu_custom_call.1} parent=1 // pred_fallthru
      _
    // Predicated region
    $region14: #{tpu_custom_call.1} parent=1 // pred_check
      _
    $region15: #{tpu_custom_call.1} parent=1 // pred_check_branch
      %40 = sbr.rel (0) target = $region17
    $region16: #{tpu_custom_call.1} parent=1 // pred_region
      %s42 = ssub.s32 1024, 1024
      %43 = vsyncadd [#allocation6], %s42
      %s44 = sshll.u32 [#allocation7], 4
      %s45 = int_to_ptr.vmem [resolvable:$true] %s44
      %50 = dma.hbm_to_vmem [thread:$0]  %s3, 1024, %s45, [#allocation6], 64, 64, 4
    $region17: #{tpu_custom_call.1} parent=1 // pred_fallthru
      _
    // Predicated region
    $region18: #{tpu_custom_call.1} parent=1 // pred_check
      _
    $region19: #{tpu_custom_call.1} parent=1 // pred_check_branch
      %52 = sbr.rel (0) target = $region21
    $region20: #{tpu_custom_call.1} parent=1 // pred_region
      _
    $region21: #{tpu_custom_call.1} parent=1 // pred_fallthru
      _
    // Predicated region
    $region22: #{tpu_custom_call.1} parent=1 // pred_check
      _
    $region23: #{tpu_custom_call.1} parent=1 // pred_check_branch
      %54 = sbr.rel (0) target = $region25
    $region24: #{tpu_custom_call.1} parent=1 // pred_region
      %55 = dma.done [#allocation3], 128
    $region25: #{tpu_custom_call.1} parent=1 // pred_fallthru
      _
    // Predicated region
    $region26: #{tpu_custom_call.1} parent=1 // pred_check
      _
    $region27: #{tpu_custom_call.1} parent=1 // pred_check_branch
      %57 = sbr.rel (0) target = $region29
    $region28: #{tpu_custom_call.1} parent=1 // pred_region
      %58 = dma.done [#allocation6], 1024
    $region29: #{tpu_custom_call.1} parent=1 // pred_fallthru
      _
    // Predicated region
    $region30: #{tpu_custom_call.1} parent=1 // pred_check
      _
    $region31: #{tpu_custom_call.1} parent=1 // pred_check_branch
      %60 = sbr.rel (0) target = $region33
    $region32: #{tpu_custom_call.1} parent=1 // pred_region
      %61 = dma.done [#allocation6], 1024
    $region33: #{tpu_custom_call.1} parent=1 // pred_fallthru
      _
    %v63 = vld [vmem:[#allocation2] sm:$0xf]
    %v64 = vld [vmem:[#allocation2 + $0x4] sm:$0xf]
    %v65 = vld [vmem:[#allocation5] sm:$0xf]
    %v66 = vld [vmem:[#allocation5 + $0x4] sm:$0xf]
    %v67 = vld [vmem:[#allocation5 + $0x8] sm:$0xf]
    %v68 = vld [vmem:[#allocation5 + $0xc] sm:$0xf]
    %v69 = vld [vmem:[#allocation5 + $0x10] sm:$0xf]
    %v70 = vld [vmem:[#allocation5 + $0x14] sm:$0xf]
    %v71 = vld [vmem:[#allocation5 + $0x18] sm:$0xf]
    %v72 = vld [vmem:[#allocation5 + $0x1c] sm:$0xf]
    %v73 = vld [vmem:[#allocation5 + $0x20] sm:$0xf]
    %v74 = vld [vmem:[#allocation5 + $0x24] sm:$0xf]
    %v75 = vld [vmem:[#allocation5 + $0x28] sm:$0xf]
    %v76 = vld [vmem:[#allocation5 + $0x2c] sm:$0xf]
    %v77 = vld [vmem:[#allocation5 + $0x30] sm:$0xf]
    %v78 = vld [vmem:[#allocation5 + $0x34] sm:$0xf]
    %v79 = vld [vmem:[#allocation5 + $0x38] sm:$0xf]
    %v80 = vld [vmem:[#allocation5 + $0x3c] sm:$0xf]
    %v81 = vld [vmem:[%s2] sm:$0x1]
    %v83 = vlaneseq
    %v84 = vshrl.u32 %v83, 7
    %v85 = vsub.s32 0, %v84
    %v86 = vrot.slane %v81, %v85
    %v90 = vunpack.c.l.b16 %v63
    %v91 = vunpack.c.l.b16 %v64
    %v92 = vpack.c.b16 %v91, %v90
    %v110 = vunpack.c.l.b16 %v65
    %v111 = vunpack.c.l.b16 %v66
    %v112 = vunpack.c.l.b16 %v67
    %v113 = vunpack.c.l.b16 %v68
    %v114 = vunpack.c.l.b16 %v69
    %v115 = vunpack.c.l.b16 %v70
    %v116 = vunpack.c.l.b16 %v71
    %v117 = vunpack.c.l.b16 %v72
    %v118 = vunpack.c.l.b16 %v73
    %v119 = vunpack.c.l.b16 %v74
    %v120 = vunpack.c.l.b16 %v75
    %v121 = vunpack.c.l.b16 %v76
    %v122 = vunpack.c.l.b16 %v77
    %v123 = vunpack.c.l.b16 %v78
    %v124 = vunpack.c.l.b16 %v79
    %v125 = vunpack.c.l.b16 %v80
    %v126 = vpack.c.b16 %v111, %v110
    %v127 = vpack.c.b16 %v113, %v112
    %v128 = vpack.c.b16 %v115, %v114
    %v129 = vpack.c.b16 %v117, %v116
    %v130 = vpack.c.b16 %v119, %v118
    %v131 = vpack.c.b16 %v121, %v120
    %v132 = vpack.c.b16 %v123, %v122
    %v133 = vpack.c.b16 %v125, %v124
    %142 = vmatprep.subr.bf16.mxu0 0
    %143 = vmatpush1.bf16.msra.mxu0 %v126
    %144 = vmatprep.subr.bf16.mxu0 0
    %145 = vmatpush1.bf16.msra.mxu0 %v127
    %146 = vmatprep.subr.bf16.mxu0 0
    %147 = vmatpush1.bf16.msra.mxu0 %v128
    %148 = vmatprep.subr.bf16.mxu0 0
    %149 = vmatpush1.bf16.msra.mxu0 %v129
    %150 = vmatprep.subr.bf16.mxu0 0
    %151 = vmatpush1.bf16.msra.mxu0 %v130
    %152 = vmatprep.subr.bf16.mxu0 0
    %153 = vmatpush1.bf16.msra.mxu0 %v131
    %154 = vmatprep.subr.bf16.mxu0 0
    %155 = vmatpush1.bf16.msra.mxu0 %v132
    %156 = vmatprep.subr.bf16.mxu0 0
    %157 = vmatpush1.bf16.msra.mxu0 %v133
    %158 = vmatprep.subr.bf16.mxu0 0
    %159 = vmatpush1.bf16.msra.mxu0 0
    %160 = vmatprep.subr.bf16.mxu0 0
    %161 = vmatpush1.bf16.msra.mxu0 0
    %162 = vmatprep.subr.bf16.mxu0 0
    %163 = vmatpush1.bf16.msra.mxu0 0
    %164 = vmatprep.subr.bf16.mxu0 0
    %165 = vmatpush1.bf16.msra.mxu0 0
    %166 = vmatprep.subr.bf16.mxu0 0
    %167 = vmatpush1.bf16.msra.mxu0 0
    %168 = vmatprep.subr.bf16.mxu0 0
    %169 = vmatpush1.bf16.msra.mxu0 0
    %170 = vmatprep.subr.bf16.mxu0 0
    %171 = vmatpush1.bf16.msra.mxu0 0
    %172 = vmatprep.subr.bf16.mxu0 0
    %173 = vmatpush1.bf16.msra.mxu0 0
    %174 = vmatprep.mubr.bf16.mxu0 0
    %175 = vmatmul.mubr.bf16.gmra.mrb[0].mxu0 %v92
    %v176 = vpop.f32.mrb[0].mxu0
    %v177 = vadd.f32 %v86, %v176
    %v178 = vpop.f32.mrb[0].mxu0
    %v179 = vpop.f32.mrb[0].mxu0
    %v180 = vadd.f32 %v86, %v179
    %v181 = vpop.f32.mrb[0].mxu0
    %182 = vdwg.mxu0
    %v183 = vmax.f32 %v177, 0.0
    %v184 = vmax.f32 %v180, 0.0
    %v185 = vpack.c.bf16 %v184, %v183
    %v186 = vld [vmem:[#allocation7] sm:$0xf]
    %v187 = vld [vmem:[#allocation7 + $0x4] sm:$0xf]
    %v188 = vld [vmem:[#allocation7 + $0x8] sm:$0xf]
    %v189 = vld [vmem:[#allocation7 + $0xc] sm:$0xf]
    %v190 = vld [vmem:[#allocation7 + $0x10] sm:$0xf]
    %v191 = vld [vmem:[#allocation7 + $0x14] sm:$0xf]
    %v192 = vld [vmem:[#allocation7 + $0x18] sm:$0xf]
    %v193 = vld [vmem:[#allocation7 + $0x1c] sm:$0xf]
    %v194 = vld [vmem:[#allocation7 + $0x20] sm:$0xf]
    %v195 = vld [vmem:[#allocation7 + $0x24] sm:$0xf]
    %v196 = vld [vmem:[#allocation7 + $0x28] sm:$0xf]
    %v197 = vld [vmem:[#allocation7 + $0x2c] sm:$0xf]
    %v198 = vld [vmem:[#allocation7 + $0x30] sm:$0xf]
    %v199 = vld [vmem:[#allocation7 + $0x34] sm:$0xf]
    %v200 = vld [vmem:[#allocation7 + $0x38] sm:$0xf]
    %v201 = vld [vmem:[#allocation7 + $0x3c] sm:$0xf]
    %v202 = vld [vmem:[%s4] sm:$0x1]
    %v204 = vlaneseq
    %v205 = vshrl.u32 %v204, 7
    %v206 = vsub.s32 0, %v205
    %v207 = vrot.slane %v202, %v206
    %v225 = vunpack.c.l.b16 %v186
    %v226 = vunpack.c.l.b16 %v187
    %v227 = vunpack.c.l.b16 %v188
    %v228 = vunpack.c.l.b16 %v189
    %v229 = vunpack.c.l.b16 %v190
    %v230 = vunpack.c.l.b16 %v191
    %v231 = vunpack.c.l.b16 %v192
    %v232 = vunpack.c.l.b16 %v193
    %v233 = vunpack.c.l.b16 %v194
    %v234 = vunpack.c.l.b16 %v195
    %v235 = vunpack.c.l.b16 %v196
    %v236 = vunpack.c.l.b16 %v197
    %v237 = vunpack.c.l.b16 %v198
    %v238 = vunpack.c.l.b16 %v199
    %v239 = vunpack.c.l.b16 %v200
    %v240 = vunpack.c.l.b16 %v201
    %v241 = vpack.c.b16 %v226, %v225
    %v242 = vpack.c.b16 %v228, %v227
    %v243 = vpack.c.b16 %v230, %v229
    %v244 = vpack.c.b16 %v232, %v231
    %v245 = vpack.c.b16 %v234, %v233
    %v246 = vpack.c.b16 %v236, %v235
    %v247 = vpack.c.b16 %v238, %v237
    %v248 = vpack.c.b16 %v240, %v239
    %257 = vmatprep.subr.bf16.mxu0 0
    %258 = vmatpush1.bf16.msra.mxu0 %v241
    %259 = vmatprep.subr.bf16.mxu0 0
    %260 = vmatpush1.bf16.msra.mxu0 %v242
    %261 = vmatprep.subr.bf16.mxu0 0
    %262 = vmatpush1.bf16.msra.mxu0 %v243
    %263 = vmatprep.subr.bf16.mxu0 0
    %264 = vmatpush1.bf16.msra.mxu0 %v244
    %265 = vmatprep.subr.bf16.mxu0 0
    %266 = vmatpush1.bf16.msra.mxu0 %v245
    %267 = vmatprep.subr.bf16.mxu0 0
    %268 = vmatpush1.bf16.msra.mxu0 %v246
    %269 = vmatprep.subr.bf16.mxu0 0
    %270 = vmatpush1.bf16.msra.mxu0 %v247
    %271 = vmatprep.subr.bf16.mxu0 0
    %272 = vmatpush1.bf16.msra.mxu0 %v248
    %273 = vmatprep.subr.bf16.mxu0 0
    %274 = vmatpush1.bf16.msra.mxu0 0
    %275 = vmatprep.subr.bf16.mxu0 0
    %276 = vmatpush1.bf16.msra.mxu0 0
    %277 = vmatprep.subr.bf16.mxu0 0
    %278 = vmatpush1.bf16.msra.mxu0 0
    %279 = vmatprep.subr.bf16.mxu0 0
    %280 = vmatpush1.bf16.msra.mxu0 0
    %281 = vmatprep.subr.bf16.mxu0 0
    %282 = vmatpush1.bf16.msra.mxu0 0
    %283 = vmatprep.subr.bf16.mxu0 0
    %284 = vmatpush1.bf16.msra.mxu0 0
    %285 = vmatprep.subr.bf16.mxu0 0
    %286 = vmatpush1.bf16.msra.mxu0 0
    %287 = vmatprep.subr.bf16.mxu0 0
    %288 = vmatpush1.bf16.msra.mxu0 0
    %289 = vmatprep.mubr.bf16.mxu0 0
    %290 = vmatmul.mubr.bf16.gmra.mrb[0].mxu0 %v185
    %v291 = vpop.f32.mrb[0].mxu0
    %v292 = vadd.f32 %v207, %v291
    %v293 = vpop.f32.mrb[0].mxu0
    %v294 = vpop.f32.mrb[0].mxu0
    %v295 = vadd.f32 %v207, %v294
    %v296 = vpop.f32.mrb[0].mxu0
    %297 = vdwg.mxu0
    %298 = vst [vmem:[#allocation8] sm:$0xff] %v292
    %299 = vst [vmem:[#allocation8 + $0x8] sm:$0xff] %v295
    // Predicated region
    $region34: #{tpu_custom_call.1} parent=1 // pred_check
      _
    $region35: #{tpu_custom_call.1} parent=1 // pred_check_branch
      %301 = sbr.rel (0) target = $region37
    $region36: #{tpu_custom_call.1} parent=1 // pred_region
      %s303 = ssub.s32 256, 256
      %304 = vsyncadd [#allocation4], %s303
      %s305 = sshll.u32 [#allocation8], 4
      %s306 = int_to_ptr.vmem [resolvable:$true] %s305
      %311 = dma.vmem_to_hbm [thread:$0]  %s306, 256, %s5, [#allocation4], 128, 128, 8
    $region37: #{tpu_custom_call.1} parent=1 // pred_fallthru
      _
    // Predicated region
    $region38: #{tpu_custom_call.1} parent=1 // pred_check
      _
    $region39: #{tpu_custom_call.1} parent=1 // pred_check_branch
      %313 = sbr.rel (0) target = $region41
    $region40: #{tpu_custom_call.1} parent=1 // pred_region
      %314 = dma.done [#allocation4], 256
    $region41: #{tpu_custom_call.1} parent=1 // pred_fallthru
      _
    %315 = vsyncpa [#allocation3], 1
    %316 = vsyncpa [#allocation6], 1
    %317 = vsyncpa [#allocation4], 1

</llo_original>
